<compile_context>
chip_gen: v6e
topology: v6e:2x2x1
jax: 0.10.0
libtpu: 0.0.40
codegen_flags: <defaults>
</compile_context>

<pallas_src>
import functools

import jax
import jax.numpy as jnp
from jax.experimental import pallas as pl
from jax.experimental.pallas import tpu as pltpu


# (dy, dx, bit-weight) of the 8 fixed 3x3 LBP filters, matching the PyTorch
# `kernel_weight` tensor under Conv2d cross-correlation semantics:
# out_c[y, x] = in[y+dy, x+dx] - in[y, x].
_LBP_OFFSETS = (
    (-1,  1,   1.0),  # top-right
    ( 0,  1,   2.0),  # right
    ( 1,  1,   4.0),  # bottom-right
    ( 1,  0,   8.0),  # bottom
    ( 1, -1,  16.0),  # bottom-left
    ( 0, -1,  32.0),  # left
    (-1, -1,  64.0),  # top-left
    (-1,  0, 128.0),  # top
)

_VMEM_LIMIT = 32 * 1024 * 1024  # fits the scoped-VMEM budget of v5e/v6e/v7x


def _pick_batch_block(n):
    """Batch elements per LBP grid step; keep >= 2 grid steps (v7x megacore)."""
    if n <= 1:
        return 1
    cap = min(8, n // 2)
    for nb in range(cap, 0, -1):
        if n % nb == 0:
            return nb
    return 1


def _pick_rows_per_chunk(h, w, budget_bytes=1 << 20):
    """Largest divisor of H whose (rows*W, 256) f32 one-hot fits the budget."""
    best = 1
    for r in range(1, h + 1):
        if h % r == 0 and r * w * 256 * 4 <= budget_bytes:
            best = r
    return best


def _lbp_hist_kernel(img_ref, hist_ref, gpad_ref, *, nb, rows_per_chunk):
    """img_ref:  (nb, 3, H, W)  RGB block (NCHW)
       hist_ref: (nb, 1, 256)   standardized 256-bin LBP histogram (lane-dense)
       gpad_ref: (H+2, W+2)     zero-padded grayscale VMEM scratch
    """
    H = img_ref.shape[2]
    W = img_ref.shape[3]
    rpc = rows_per_chunk
    n_chunks = H // rpc

    # Re-zero the scratch each grid step (safe under megacore 'parallel');
    # interior is overwritten per image, border stays 0 -> zero padding.
    gpad_ref[...] = jnp.zeros_like(gpad_ref)

    # Hoisted constants (do not re-create inside loops).
    bins3 = jax.lax.broadcasted_iota(jnp.float32, (rpc, W, 256), 2)

    for b in range(nb):
        # rgb2gray fused in-kernel (standard luminance weights; rgb2gray is not
        # defined in the reference module).
        gray = (0.299 * img_ref[b, 0] + 0.587 * img_ref[b, 1]
                + 0.114 * img_ref[b, 2])                       # (H, W)
        gpad_ref[pl.ds(1, H), pl.ds(1, W)] = gray

        # conv -> threshold (>= 0) -> scale by 2^c -> sum over the 8 channels
        lbp = jnp.zeros((H, W), jnp.float32)
        for dy, dx, wgt in _LBP_OFFSETS:
            nbv = gpad_ref[pl.ds(1 + dy, H), pl.ds(1 + dx, W)]
            lbp = lbp + jnp.where(nbv - gray >= 0.0, wgt, 0.0)

        # Row-chunked 256-bin histogram: the one-hot intermediate is capped at
        # rpc*W*256*4 bytes so the kernel stays VMEM-safe at large H, W.
        hist = jnp.zeros((1, 256), jnp.float32)
        for c in range(n_chunks):
            seg = lbp[c * rpc:(c + 1) * rpc, :]                # (rpc, W)
            eq = (seg[:, :, None] == bins3).astype(jnp.float32)
            hist = hist + jnp.sum(jnp.sum(eq, axis=0), axis=0, keepdims=True)

        # Standardize (torch.std is unbiased: ddof = 1 over 256 bins); use
        # rsqrt (EUP slot) instead of a VPU divide.
        hmean = jnp.mean(hist)
        var = jnp.sum((hist - hmean) ** 2) * (1.0 / 255.0)
        hist_ref[b, :, :] = (hist - hmean) * jax.lax.rsqrt(var)


def lbp_hist_layer(img):
    """LBPKernel.forward restricted to the histogram output that LBPModel uses.
    img: (N, 3, H, W) f32 -> standardized LBP histogram (N, 256) f32.
    (The standardized lbp_img output of LBPKernel is discarded by
    LBPModel.forward, so it is not computed here.)"""
    N, C, H, W = img.shape
    nb = _pick_batch_block(N)
    rpc = _pick_rows_per_chunk(H, W)

    hist = pl.pallas_call(
        functools.partial(_lbp_hist_kernel, nb=nb, rows_per_chunk=rpc),
        out_shape=jax.ShapeDtypeStruct((N, 1, 256), jnp.float32),
        grid=(N // nb,),
        in_specs=[pl.BlockSpec((nb, C, H, W), lambda i: (i, 0, 0, 0))],
        out_specs=pl.BlockSpec((nb, 1, 256), lambda i: (i, 0, 0)),
        scratch_shapes=[pltpu.VMEM((H + 2, W + 2), jnp.float32)],
        compiler_params=pltpu.CompilerParams(
            dimension_semantics=("parallel",),
            vmem_limit_bytes=_VMEM_LIMIT),
    )(img)
    return hist.reshape(N, 256)


def _matmul_bias_kernel(x_ref, w_ref, b_ref, o_ref, acc_ref, *, act):
    @pl.when(pl.program_id(1) == 0)
    def _():
        acc_ref[...] = jnp.zeros_like(acc_ref)

    acc_ref[...] += jnp.dot(x_ref[...], w_ref[...],
                            preferred_element_type=jnp.float32)

    @pl.when(pl.program_id(1) == pl.num_programs(1) - 1)
    def _():
        y = acc_ref[...] + b_ref[...]
        if act == "relu":
            y = jnp.maximum(y, 0.0)
        o_ref[...] = y.astype(o_ref.dtype)


def _pick_tile(dim, candidates):
    for c in candidates:
        if dim % c == 0:
            return c
    return dim


def linear(x, w, b, act="none"):
    """y = act(x @ w + b).  x:(M,K)  w:(K,N)  b:(1,N)  -> (M,N) float32.
    K-tiled with an f32 VMEM accumulator; operands may be bf16 (f32 accumulate)."""
    M, K = x.shape
    N = w.shape[1]
    tk = _pick_tile(K, (512, 256, 128))
    tn = _pick_tile(N, (256, 128))
    return pl.pallas_call(
        functools.partial(_matmul_bias_kernel, act=act),
        out_shape=jax.ShapeDtypeStruct((M, N), jnp.float32),
        grid=(N // tn, K // tk),
        in_specs=[pl.BlockSpec((M, tk), lambda j, k: (0, k)),
                  pl.BlockSpec((tk, tn), lambda j, k: (k, j)),
                  pl.BlockSpec((1, tn), lambda j, k: (0, j))],
        out_specs=pl.BlockSpec((M, tn), lambda j, k: (0, j)),
        scratch_shapes=[pltpu.VMEM((M, tn), jnp.float32)],
        compiler_params=pltpu.CompilerParams(
            dimension_semantics=("parallel", "arbitrary"),
            vmem_limit_bytes=_VMEM_LIMIT),
    )(x, w, b)


def _head_kernel(feat_ref, hist_ref, fcw_ref, fcb_ref, *refs, n_reg):
    """Fused fc_lbp (+ReLU), concat, and regressor MLP (ReLU..., Sigmoid).
    refs = [w0a, w0b, b0, w1, b1, ..., w_{n_reg-1}, b_{n_reg-1}, out_ref]."""
    out_ref = refs[-1]
    w0a_ref, w0b_ref, b0_ref = refs[0], refs[1], refs[2]

    # fc_lbp: Linear(256, 256) + ReLU
    h_lbp = jnp.dot(hist_ref[...], fcw_ref[...],
                    preferred_element_type=jnp.float32) + fcb_ref[...]
    h_lbp = jnp.maximum(h_lbp, 0.0)

    # Regressor layer 0 applied to the (implicit) concat [feat, h_lbp]:
    # the concat is eliminated by splitting its weight into two blocks.
    h = (jnp.dot(feat_ref[...], w0a_ref[...], preferred_element_type=jnp.float32)
         + jnp.dot(h_lbp, w0b_ref[...], preferred_element_type=jnp.float32)
         + b0_ref[...])
    for i in range(1, n_reg):
        h = jnp.maximum(h, 0.0)
        w_ref = refs[3 + 2 * (i - 1)]
        b_ref = refs[4 + 2 * (i - 1)]
        h = jnp.dot(h, w_ref[...], preferred_element_type=jnp.float32) + b_ref[...]

    out_ref[...] = 1.0 / (1.0 + jnp.exp(-h))   # final Sigmoid


def lbp_head(feat, lbp_hist, params):
    """One pallas_call for fc_lbp + concat + regressor (all weights VMEM-resident)."""
    M = feat.shape[0]
    feat_dim = feat.shape[1]
    reg_w, reg_b = params["reg_w"], params["reg_b"]
    n_reg = len(reg_w)
    out_dim = reg_w[-1].shape[1]

    # Split reg_w[0] into the feat- and lbp- facing blocks (removes the concat).
    w0a = reg_w[0][:feat_dim, :]
    w0b = reg_w[0][feat_dim:, :]

    ops = [feat, lbp_hist, params["fc_lbp_w"], params["fc_lbp_b"], w0a, w0b, reg_b[0]]
    for i in range(1, n_reg):
        ops += [reg_w[i], reg_b[i]]

    def spec(shape):
        nd = len(shape)
        return pl.BlockSpec(shape, lambda i, _nd=nd: (0,) * _nd)

    return pl.pallas_call(
        functools.partial(_head_kernel, n_reg=n_reg),
        out_shape=jax.ShapeDtypeStruct((M, out_dim), jnp.float32),
        grid=(1,),
        in_specs=[spec(a.shape) for a in ops],
        out_specs=spec((M, out_dim)),
        compiler_params=pltpu.CompilerParams(vmem_limit_bytes=_VMEM_LIMIT),
    )(*ops)


def init_params(key, H, W, regressor=(64, 1)):
    """Deterministic synthetic parameters (shapes follow the module __init__)."""
    ks = jax.random.split(key, 4 + 2 * len(regressor))
    feat_dim = 512                      # cfg['backbone'] <= 'resnet34' -> 512-d feat
    flat_in = 3 * H * W
    p = {
        # bf16 weight: the backbone matmul is weight-bandwidth bound at batch=2.
        "backbone_w": (0.05 * jax.random.normal(
            ks[0], (flat_in, feat_dim), jnp.float32)).astype(jnp.bfloat16),
        "backbone_b": 0.05 * jax.random.normal(ks[1], (1, feat_dim), jnp.float32),
        "fc_lbp_w": 0.05 * jax.random.normal(ks[2], (256, 256), jnp.float32),
        "fc_lbp_b": 0.05 * jax.random.normal(ks[3], (1, 256), jnp.float32),
        "reg_w": [],
        "reg_b": [],
    }
    dims = [feat_dim + 256] + list(regressor)   # fc_in = 512 + 256
    for i in range(len(dims) - 1):
        p["reg_w"].append(0.05 * jax.random.normal(
            ks[4 + 2 * i], (dims[i], dims[i + 1]), jnp.float32))
        p["reg_b"].append(0.05 * jax.random.normal(
            ks[5 + 2 * i], (1, dims[i + 1]), jnp.float32))
    return p


def lbp_model_forward(img, params):
    """LBPModel.forward with cfg = {'backbone': 'resnet18', 'lbp_in_model': True,
    'regressor': [64, 1], 'Data': {'batch_size': N}}."""
    N = img.shape[0]

    # TODO(synk): CNN_ResNet backbone is not defined in the reference module;
    # substitute a deterministic bf16 linear feature extractor producing the
    # flattened 512-d features that `feat.view(feat.size(0), -1)` would yield.
    flat = img.reshape(N, -1).astype(jnp.bfloat16)
    feat = linear(flat, params["backbone_w"], params["backbone_b"], act="none")

    # lbp_in_model=True path: standardized LBP histogram from the fused kernel.
    lbp_hist = lbp_hist_layer(img)

    # fc_lbp + concat + regressor fused into one kernel.
    return lbp_head(feat, lbp_hist, params)


if __name__ == "__main__":
    N, C, H, W = 2, 3, 16, 16
    key = jax.random.PRNGKey(0)
    k_img, k_par = jax.random.split(key)
    img = jax.random.uniform(k_img, (N, C, H, W), dtype=jnp.float32)
    params = init_params(k_par, H, W, regressor=(64, 1))

    out = lbp_model_forward(img, params)
    out = jax.block_until_ready(out)
    assert out.shape == (N, 1) and out.dtype == jnp.float32
    print("KERNEL_OK")
</pallas_src>

<mosaic_0001>
module attributes {stable_mosaic.version = 11 : i64} {
  func.func @_matmul_bias_kernel(%arg0: i32, %arg1: i32, %arg2: memref<2x256xbf16, #tpu.memory_space<vmem>>, %arg3: memref<256x256xbf16, #tpu.memory_space<vmem>>, %arg4: memref<1x256xf32, #tpu.memory_space<vmem>>, %arg5: memref<2x256xf32, #tpu.memory_space<vmem>>, %arg6: memref<2x256xf32, #tpu.memory_space<vmem>>) attributes {dimension_semantics = [#tpu.dimension_semantics<parallel>, #tpu.dimension_semantics<arbitrary>], iteration_bounds = array<i64: 2, 3>, scalar_prefetch = 0 : i64, scratch_operands = 1 : i64, tpu.core_type = #tpu.core_type<tc>, window_params = [{transform_indices = @transform_0, window_bounds = array<i64: 2, 256>}, {transform_indices = @transform_1, window_bounds = array<i64: 256, 256>}, {transform_indices = @transform_2, window_bounds = array<i64: 1, 256>}, {transform_indices = @transform_3, window_bounds = array<i64: 2, 256>}]} {
    %c0_i32 = arith.constant 0 : i32
    %0 = arith.cmpi eq, %arg1, %c0_i32 : i32
    %1 = arith.extui %0 : i1 to i32
    %c0_i32_0 = arith.constant 0 : i32
    %2 = arith.cmpi ne, %1, %c0_i32_0 : i32
    scf.if %2 {
      %cst_9 = arith.constant 0.000000e+00 : f32
      %12 = vector.broadcast %cst_9 : f32 to vector<2x256xf32>
      %c0_10 = arith.constant 0 : index
      %c0_11 = arith.constant 0 : index
      %13 = vector.load %arg6[%c0_10, %c0_11] : memref<2x256xf32, #tpu.memory_space<vmem>>, vector<2x256xf32>
      tpu.vector_store %arg6[%c0_10, %c0_11], %12 {strides = array<i32>} : memref<2x256xf32, #tpu.memory_space<vmem>>, vector<2x256xf32>,
    } else {
    }
    %c0 = arith.constant 0 : index
    %c0_1 = arith.constant 0 : index
    %3 = vector.load %arg6[%c0, %c0_1] : memref<2x256xf32, #tpu.memory_space<vmem>>, vector<2x256xf32>
    %c0_2 = arith.constant 0 : index
    %c0_3 = arith.constant 0 : index
    %4 = vector.load %arg2[%c0_2, %c0_3] : memref<2x256xbf16, #tpu.memory_space<vmem>>, vector<2x256xbf16>
    %c0_4 = arith.constant 0 : index
    %c0_5 = arith.constant 0 : index
    %5 = vector.load %arg3[%c0_4, %c0_5] : memref<256x256xbf16, #tpu.memory_space<vmem>>, vector<256x256xbf16>
    %cst = arith.constant dense<0.000000e+00> : vector<2x256xf32>
    %6 = tpu.matmul %4, %5, %cst {dimension_numbers = #tpu.dot_dimension_numbers<[1], [0], [0], [1], [0, 0, 1, 1], [], []>} : vector<2x256xbf16>, vector<256x256xbf16>, vector<2x256xf32> -> vector<2x256xf32>
    %7 = arith.addf %3, %6 : vector<2x256xf32>
    %c0_6 = arith.constant 0 : index
    %c0_7 = arith.constant 0 : index
    %8 = vector.load %arg6[%c0_6, %c0_7] : memref<2x256xf32, #tpu.memory_space<vmem>>, vector<2x256xf32>
    tpu.vector_store %arg6[%c0_6, %c0_7], %7 {strides = array<i32>} : memref<2x256xf32, #tpu.memory_space<vmem>>, vector<2x256xf32>,
    %c2_i32 = arith.constant 2 : i32
    %9 = arith.cmpi eq, %arg1, %c2_i32 : i32
    %10 = arith.extui %9 : i1 to i32
    %c0_i32_8 = arith.constant 0 : i32
    %11 = arith.cmpi ne, %10, %c0_i32_8 : i32
    scf.if %11 {
      %c0_9 = arith.constant 0 : index
      %c0_10 = arith.constant 0 : index
      %12 = vector.load %arg6[%c0_9, %c0_10] : memref<2x256xf32, #tpu.memory_space<vmem>>, vector<2x256xf32>
      %c0_11 = arith.constant 0 : index
      %c0_12 = arith.constant 0 : index
      %13 = vector.load %arg4[%c0_11, %c0_12] : memref<1x256xf32, #tpu.memory_space<vmem>>, vector<1x256xf32>
      %14 = vector.broadcast %13 : vector<1x256xf32> to vector<2x256xf32>
      %15 = arith.addf %12, %14 : vector<2x256xf32>
      %c0_13 = arith.constant 0 : index
      %c0_14 = arith.constant 0 : index
      %16 = vector.load %arg5[%c0_13, %c0_14] : memref<2x256xf32, #tpu.memory_space<vmem>>, vector<2x256xf32>
      tpu.vector_store %arg5[%c0_13, %c0_14], %15 {strides = array<i32>} : memref<2x256xf32, #tpu.memory_space<vmem>>, vector<2x256xf32>,
    } else {
    }
    return
  }
  func.func @transform_0(%arg0: i32, %arg1: i32) -> (i32, i32) {
    %c0_i32 = arith.constant 0 : i32
    %c0_i32_0 = arith.constant 0 : i32
    return %c0_i32, %arg1 : i32, i32
  }
  func.func @transform_1(%arg0: i32, %arg1: i32) -> (i32, i32) {
    %c0_i32 = arith.constant 0 : i32
    return %arg1, %arg0 : i32, i32
  }
  func.func @transform_2(%arg0: i32, %arg1: i32) -> (i32, i32) {
    %c0_i32 = arith.constant 0 : i32
    %c0_i32_0 = arith.constant 0 : i32
    return %c0_i32, %arg0 : i32, i32
  }
  func.func @transform_3(%arg0: i32, %arg1: i32) -> (i32, i32) {
    %c0_i32 = arith.constant 0 : i32
    %c0_i32_0 = arith.constant 0 : i32
    return %c0_i32, %arg0 : i32, i32
  }
}

</mosaic_0001>

<llo_original>
// kernel: tpu_custom_call.1
$region0: #{tpu_custom_call.1}
  #allocation0 [shape = 'u32[]', space=smem, size = 0x4, offset = 0x4, fixed_abs, tag = 'smem constant byte address 0x4 - core index']
  #allocation1 [shape = 'u32[144,128]{1,0:T(1,128)}', space=vmem, size = 0x12000, scoped, tag = 'internal scratch']
  #allocation2 [shape = 'f32[2,256]{1,0:T(2,128)}', space=vmem, size = 0x800, scoped, tag = 'scratch operand']
  %s0 = inlined_call_operand.hbm [shape: bf16[2,768], index: 0, kind: input, shape index: {}]
  %s1 = inlined_call_operand.hbm [shape: bf16[768,512], index: 1, kind: input, shape index: {}]
  %s2 = inlined_call_operand.hbm [shape: f32[1,512], index: 2, kind: input, shape index: {}]
  %s3 = inlined_call_operand.hbm [shape: f32[2,512], index: 3, kind: output, shape index: {}]
  %s4 = sld [smem:[#allocation0]]
  $region65: #{tpu_custom_call.1} parent=0
    _
  %s6 = ssub.s32 1, %s4
  %s7 = scalar_select 0, %s6, %s4
  $region1: #{tpu_custom_call.1} parent=0
    #allocation3 [shape = 'u8[2048]{0}', space=vmem, size = 0x800, scoped, tag = 'input window, operand 0']
    #allocation4 [shape = 's32[2]{0}', space=sflag, size = 0x8, scoped, tag = 'scoped memory for tpu_custom_call.1']
    #allocation5 [shape = 's32[2]{0}', space=sflag, size = 0x8, scoped, tag = 'scoped memory for tpu_custom_call.1']
    #allocation6 [shape = 'u8[262144]{0}', space=vmem, size = 0x40000, scoped, tag = 'input window, operand 1']
    #allocation7 [shape = 's32[2]{0}', space=sflag, size = 0x8, scoped, tag = 'scoped memory for tpu_custom_call.1']
    #allocation8 [shape = 'u8[2048]{0}', space=vmem, size = 0x800, scoped, tag = 'input window, operand 2']
    #allocation9 [shape = 'u8[4096]{0}', space=vmem, size = 0x1000, scoped, tag = 'output window, operand 0']
    %8 = vsyncpa [#allocation4], 0
    %s9 = scalar_lea.sflag [#allocation4], 1
    %10 = vsyncpa %s9, 0
    %11 = vsyncpa [#allocation7], 0
    %s12 = scalar_lea.sflag [#allocation7], 1
    %13 = vsyncpa %s12, 0
    %14 = vsyncpa [#allocation5], 0
    %s15 = scalar_lea.sflag [#allocation5], 1
    %16 = vsyncpa %s15, 0
    loop: start=0, step=1, limit=8
    $region2: #{tpu_custom_call.1} parent=1 // loop_pre_header
      _
    $region3: #{tpu_custom_call.1} parent=1 // loop_header
      %s18 = sphi 0, %s22
      %p19 = scmp.ge.s32.totalorder %s18, 8
      %s25 = sphi 0, %s37
      %s26 = sphi 0, %s33
      %s27 = sphi 0, %s25
      %s28 = sphi 0, %s26
      %s29 = sphi 0, %s27
      %s30 = sphi 0, %s28
      %s40 = sphi 0, %s42
      %s43 = sphi 0, %s40
      %s44 = sphi 0, %s43
      %s60 = sphi 0, %s44
      %s68 = sphi 0, %s70
      %s71 = sphi 0, %s68
      %s72 = sphi 0, %s71
      %s88 = sphi 0, %s72
      %s94 = sphi 0, %s96
      %s97 = sphi 0, %s94
      %s98 = sphi 0, %s97
      %s114 = sphi 0, %s98
      %s120 = sphi 0, %s122
      %s123 = sphi 0, %s120
      %s124 = sphi 0, %s123
      %s140 = sphi 0, %s124
    $region4: #{tpu_custom_call.1} parent=1 // loop_header_branch
      %21 = sbr.rel (%p19) target = $region8
    $region5: #{tpu_custom_call.1} parent=1 // loop_body
      %s23 = ssub.s32 %s18, 1
      %s24 = ssub.s32 %s18, 2
      %s31 = sadd.s32 1, %s26
      %p32 = scmp.ge.s32.totalorder %s31, 3
      %s33 = scalar_select %p32, 0, %s31
      %s34 = sadd.s32 1, %s25
      %s35 = scalar_select %p32, %s34, %s25
      %p36 = scmp.ge.s32.totalorder %s35, 2
      %s37 = scalar_select %p36, 0, %s35
      %s38 = ssub.s32 %s26, %s33
      %p39 = scmp.eq.s32.totalorder %s38, 0
      %s41 = sadd.s32 %s40, 1
      %s42 = scalar_select %p39, %s40, %s41
      %p45 = pneg %p39
      %p46 = scmp.eq.s32.totalorder %s18, 5
      %p47 = por %p45, %p46
      %p48 = scmp.ne.s32.totalorder %s40, %s43
      %p49 = scmp.eq.s32.totalorder %s18, 0
      %p50 = por %p48, %p49
      %p51 = scmp.ne.s32.totalorder %s40, %s43
      %p52 = scmp.eq.s32.totalorder %s23, 5
      %p53 = por %p51, %p52
      %p54 = scmp.ne.s32.totalorder %s43, %s44
      %p55 = scmp.eq.s32.totalorder %s23, 0
      %p56 = por %p54, %p55
      %p57 = scmp.ne.s32.totalorder %s43, %s44
      %p58 = scmp.eq.s32.totalorder %s24, 5
      %p59 = por %p57, %p58
      %p61 = scmp.ne.s32.totalorder %s44, %s60
      %p62 = scmp.eq.s32.totalorder %s24, 0
      %p63 = por %p61, %p62
      %s64 = ssub.s32 %s26, %s33
      %s65 = ssub.s32 %s25, %s37
      %s66 = sor.u32 %s64, %s65
      %p67 = scmp.eq.s32.totalorder %s66, 0
      %s69 = sadd.s32 %s68, 1
      %s70 = scalar_select %p67, %s68, %s69
      %p73 = pneg %p67
      %p74 = scmp.eq.s32.totalorder %s18, 5
      %p75 = por %p73, %p74
      %p76 = scmp.ne.s32.totalorder %s68, %s71
      %p77 = scmp.eq.s32.totalorder %s18, 0
      %p78 = por %p76, %p77
      %p79 = scmp.ne.s32.totalorder %s68, %s71
      %p80 = scmp.eq.s32.totalorder %s23, 5
      %p81 = por %p79, %p80
      %p82 = scmp.ne.s32.totalorder %s71, %s72
      %p83 = scmp.eq.s32.totalorder %s23, 0
      %p84 = por %p82, %p83
      %p85 = scmp.ne.s32.totalorder %s71, %s72
      %p86 = scmp.eq.s32.totalorder %s24, 5
      %p87 = por %p85, %p86
      %p89 = scmp.ne.s32.totalorder %s72, %s88
      %p90 = scmp.eq.s32.totalorder %s24, 0
      %p91 = por %p89, %p90
      %s92 = ssub.s32 %s25, %s37
      %p93 = scmp.eq.s32.totalorder %s92, 0
      %s95 = sadd.s32 %s94, 1
      %s96 = scalar_select %p93, %s94, %s95
      %p99 = pneg %p93
      %p100 = scmp.eq.s32.totalorder %s18, 5
      %p101 = por %p99, %p100
      %p102 = scmp.ne.s32.totalorder %s94, %s97
      %p103 = scmp.eq.s32.totalorder %s18, 0
      %p104 = por %p102, %p103
      %p105 = scmp.ne.s32.totalorder %s94, %s97
      %p106 = scmp.eq.s32.totalorder %s23, 5
      %p107 = por %p105, %p106
      %p108 = scmp.ne.s32.totalorder %s97, %s98
      %p109 = scmp.eq.s32.totalorder %s23, 0
      %p110 = por %p108, %p109
      %p111 = scmp.ne.s32.totalorder %s97, %s98
      %p112 = scmp.eq.s32.totalorder %s24, 5
      %p113 = por %p111, %p112
      %p115 = scmp.ne.s32.totalorder %s98, %s114
      %p116 = scmp.eq.s32.totalorder %s24, 0
      %p117 = por %p115, %p116
      %s118 = ssub.s32 %s25, %s37
      %p119 = scmp.eq.s32.totalorder %s118, 0
      %s121 = sadd.s32 %s120, 1
      %s122 = scalar_select %p119, %s120, %s121
      %p125 = pneg %p119
      %p126 = scmp.eq.s32.totalorder %s18, 5
      %p127 = por %p125, %p126
      %p128 = scmp.ne.s32.totalorder %s120, %s123
      %p129 = scmp.eq.s32.totalorder %s18, 0
      %p130 = por %p128, %p129
      %p131 = scmp.ne.s32.totalorder %s120, %s123
      %p132 = scmp.eq.s32.totalorder %s23, 5
      %p133 = por %p131, %p132
      %p134 = scmp.ne.s32.totalorder %s123, %s124
      %p135 = scmp.eq.s32.totalorder %s23, 0
      %p136 = por %p134, %p135
      %p137 = scmp.ne.s32.totalorder %s123, %s124
      %p138 = scmp.eq.s32.totalorder %s24, 5
      %p139 = por %p137, %p138
      %p141 = scmp.ne.s32.totalorder %s124, %s140
      %p142 = scmp.eq.s32.totalorder %s24, 0
      %p143 = por %p141, %p142
      %p144 = scmp.le.s32.totalorder 1, %s18
      %p145 = scmp.lt.s32.totalorder %s18, 7
      %p146 = pnand %p144, %p145
      %p147 = pneg %p146
      // Predicated region
      $region9: #{tpu_custom_call.1} parent=5 // pred_check
        _
      $region10: #{tpu_custom_call.1} parent=5 // pred_check_branch
        %149 = sbr.rel (%p146) target = $region12
      $region11: #{tpu_custom_call.1} parent=5 // pred_region
        %s150 = ssub.s32 %s18, 1
      $region12: #{tpu_custom_call.1} parent=5 // pred_fallthru
        _
      %p151 = scmp.lt.s32.totalorder %s18, 6
      // Predicated region
      $region13: #{tpu_custom_call.1} parent=5 // pred_check
        %p152 = pneg %p151
      $region14: #{tpu_custom_call.1} parent=5 // pred_check_branch
        %154 = sbr.rel (%p152) target = $region16
      $region15: #{tpu_custom_call.1} parent=5 // pred_region
        // Predicated region
        $region17: #{tpu_custom_call.1} parent=15 // pred_check
          %p155 = pneg %p50
        $region18: #{tpu_custom_call.1} parent=15 // pred_check_branch
          %157 = sbr.rel (%p155) target = $region20
        $region19: #{tpu_custom_call.1} parent=15 // pred_region
          %s158 = sand.u32 %s40, 1
          %s159 = scalar_lea.sflag [#allocation4], %s158
          %s160 = sand.u32 %s40, 1
          %s161 = smul.addr %s160, 2
          %s162 = scalar_lea.vmem [#allocation3], %s161
          %s163 = smul.u32 2, %s26
          %s165 = ssub.s32 32, 32
          %166 = vsyncadd %s159, %s165
          %s167 = smul.addr %s163, 16
          %s168 = scalar_lea.hbm %s0, %s167
          %s170 = sshll.u32 %s162, 4
          %s171 = int_to_ptr.vmem [resolvable:$true] %s170
          %173 = dma.hbm_to_vmem [thread:$0]  %s168, 32, %s171, %s159
        $region20: #{tpu_custom_call.1} parent=15 // pred_fallthru
          _
        // Predicated region
        $region21: #{tpu_custom_call.1} parent=15 // pred_check
          %p174 = pneg %p78
        $region22: #{tpu_custom_call.1} parent=15 // pred_check_branch
          %176 = sbr.rel (%p174) target = $region24
        $region23: #{tpu_custom_call.1} parent=15 // pred_region
          %s177 = sand.u32 %s18, 1
          %s178 = scalar_lea.sflag [#allocation7], %s177
          %s179 = sand.u32 %s68, 1
          %s180 = smul.addr %s179, 256
          %s181 = scalar_lea.vmem [#allocation6], %s180
          %s182 = smul.u32 32, %s26
          %s183 = smul.u32 2, %s25
          %s185 = ssub.s32 4096, 4096
          %186 = vsyncadd %s178, %s185
          %s187 = smul.addr %s182, 4
          %s188 = sadd.s32 %s183, %s187
          %s189 = smul.addr %s188, 64
          %s190 = scalar_lea.hbm %s1, %s189
          %s191 = sshll.u32 %s181, 4
          %s192 = int_to_ptr.vmem [resolvable:$true] %s191
          %197 = dma.hbm_to_vmem [thread:$0]  %s190, 4096, %s192, %s178, 256, 128, 8
        $region24: #{tpu_custom_call.1} parent=15 // pred_fallthru
          _
        // Predicated region
        $region25: #{tpu_custom_call.1} parent=15 // pred_check
          %p198 = pneg %p104
        $region26: #{tpu_custom_call.1} parent=15 // pred_check_branch
          %200 = sbr.rel (%p198) target = $region28
        $region27: #{tpu_custom_call.1} parent=15 // pred_region
          %s201 = sand.u32 %s18, 1
          %s202 = scalar_lea.sflag [#allocation7], %s201
          %s203 = sand.u32 %s94, 1
          %s204 = smul.addr %s203, 2
          %s205 = scalar_lea.vmem [#allocation8], %s204
          %s206 = smul.u32 2, %s25
          %s208 = ssub.s32 32, 32
          %209 = vsyncadd %s202, %s208
          %s210 = smul.addr %s206, 16
          %s211 = scalar_lea.hbm %s2, %s210
          %s213 = sshll.u32 %s205, 4
          %s214 = int_to_ptr.vmem [resolvable:$true] %s213
          %216 = dma.hbm_to_vmem [thread:$0]  %s211, 32, %s214, %s202
        $region28: #{tpu_custom_call.1} parent=15 // pred_fallthru
          _
      $region16: #{tpu_custom_call.1} parent=5 // pred_fallthru
        _
      %p217 = scmp.le.s32.totalorder 1, %s18
      %p218 = scmp.lt.s32.totalorder %s18, 7
      %p219 = pnand %p217, %p218
      %p220 = pneg %p219
      // Predicated region
      $region29: #{tpu_custom_call.1} parent=5 // pred_check
        _
      $region30: #{tpu_custom_call.1} parent=5 // pred_check_branch
        %222 = sbr.rel (%p219) target = $region32
      $region31: #{tpu_custom_call.1} parent=5 // pred_region
        %s223 = ssub.s32 %s18, 1
        %s224 = sand.u32 %s43, 1
        %s225 = scalar_lea.sflag [#allocation4], %s224
        %s226 = sand.u32 %s43, 1
        %s227 = smul.addr %s226, 2
        %s228 = scalar_lea.vmem [#allocation3], %s227
        // Predicated region
        $region33: #{tpu_custom_call.1} parent=31 // pred_check
          %p229 = pneg %p56
        $region34: #{tpu_custom_call.1} parent=31 // pred_check_branch
          %231 = sbr.rel (%p229) target = $region36
        $region35: #{tpu_custom_call.1} parent=31 // pred_region
          %232 = dma.done %s225, 32
        $region36: #{tpu_custom_call.1} parent=31 // pred_fallthru
          _
        %s233 = sand.u32 %s23, 1
        %s234 = scalar_lea.sflag [#allocation7], %s233
        %s235 = sand.u32 %s71, 1
        %s236 = smul.addr %s235, 256
        %s237 = scalar_lea.vmem [#allocation6], %s236
        // Predicated region
        $region37: #{tpu_custom_call.1} parent=31 // pred_check
          %p238 = pneg %p84
        $region38: #{tpu_custom_call.1} parent=31 // pred_check_branch
          %240 = sbr.rel (%p238) target = $region40
        $region39: #{tpu_custom_call.1} parent=31 // pred_region
          %241 = dma.done %s234, 4096
        $region40: #{tpu_custom_call.1} parent=31 // pred_fallthru
          _
        %s242 = sand.u32 %s23, 1
        %s243 = scalar_lea.sflag [#allocation7], %s242
        %s244 = sand.u32 %s97, 1
        %s245 = smul.addr %s244, 2
        %s246 = scalar_lea.vmem [#allocation8], %s245
        // Predicated region
        $region41: #{tpu_custom_call.1} parent=31 // pred_check
          %p247 = pneg %p110
        $region42: #{tpu_custom_call.1} parent=31 // pred_check_branch
          %249 = sbr.rel (%p247) target = $region44
        $region43: #{tpu_custom_call.1} parent=31 // pred_region
          %250 = dma.done %s243, 32
        $region44: #{tpu_custom_call.1} parent=31 // pred_fallthru
          _
        %s251 = sand.u32 %s43, 1
        %s252 = scalar_lea.sflag [#allocation4], %s251
        %s253 = sand.u32 %s43, 1
        %s254 = smul.addr %s253, 2
        %s255 = scalar_lea.vmem [#allocation3], %s254
        %p256 = pneg %p56
        %p257 = pneg %p53
        %s258 = sand.u32 %s23, 1
        %s259 = scalar_lea.sflag [#allocation7], %s258
        %s260 = sand.u32 %s71, 1
        %s261 = smul.addr %s260, 256
        %s262 = scalar_lea.vmem [#allocation6], %s261
        %p263 = pneg %p84
        %p264 = pneg %p81
        %s265 = sand.u32 %s23, 1
        %s266 = scalar_lea.sflag [#allocation7], %s265
        %s267 = sand.u32 %s97, 1
        %s268 = smul.addr %s267, 2
        %s269 = scalar_lea.vmem [#allocation8], %s268
        %p270 = pneg %p110
        %p271 = pneg %p107
        %p272 = pneg %p136
        %p273 = pneg %p133
        %s274 = sand.u32 %s123, 1
        %s275 = scalar_lea.sflag [#allocation5], %s274
        %s276 = sand.u32 %s123, 1
        %s277 = smul.addr %s276, 4
        %s278 = scalar_lea.vmem [#allocation9], %s277
        %s279 = smul.u32 2, %s28
        %s280 = smul.u32 32, %s28
        %s281 = smul.u32 2, %s27
        %s282 = smul.u32 2, %s27
        %s283 = smul.u32 2, %s27
        %p284 = scmp.eq.s32.totalorder %s28, 0
        // Predicated region
        $region45: #{tpu_custom_call.1} parent=31 // pred_check
          %p285 = pneg %p284
        $region46: #{tpu_custom_call.1} parent=31 // pred_check_branch
          %287 = sbr.rel (%p285) target = $region48
        $region47: #{tpu_custom_call.1} parent=31 // pred_region
          %288 = vst [vmem:[#allocation2] sm:$0xf] 0.0
        $region48: #{tpu_custom_call.1} parent=31 // pred_fallthru
          _
        %v289 = vld [vmem:[#allocation2] sm:$0xf]
        %v290 = vld [vmem:[%s228] sm:$0x3]
        %v291 = vld [vmem:[%s237] sm:$0xff]
        %v292 = vld [vmem:[%s237 + $0x8] sm:$0xff]
        %v293 = vld [vmem:[%s237 + $0x10] sm:$0xff]
        %v294 = vld [vmem:[%s237 + $0x18] sm:$0xff]
        %v295 = vld [vmem:[%s237 + $0x20] sm:$0xff]
        %v296 = vld [vmem:[%s237 + $0x28] sm:$0xff]
        %v297 = vld [vmem:[%s237 + $0x30] sm:$0xff]
        %v298 = vld [vmem:[%s237 + $0x38] sm:$0xff]
        %v299 = vld [vmem:[%s237 + $0x40] sm:$0xff]
        %v300 = vld [vmem:[%s237 + $0x48] sm:$0xff]
        %v301 = vld [vmem:[%s237 + $0x50] sm:$0xff]
        %v302 = vld [vmem:[%s237 + $0x58] sm:$0xff]
        %v303 = vld [vmem:[%s237 + $0x60] sm:$0xff]
        %v304 = vld [vmem:[%s237 + $0x68] sm:$0xff]
        %v305 = vld [vmem:[%s237 + $0x70] sm:$0xff]
        %v306 = vld [vmem:[%s237 + $0x78] sm:$0xff]
        %v307 = vld [vmem:[%s237 + $0x80] sm:$0xff]
        %v308 = vld [vmem:[%s237 + $0x88] sm:$0xff]
        %v309 = vld [vmem:[%s237 + $0x90] sm:$0xff]
        %v310 = vld [vmem:[%s237 + $0x98] sm:$0xff]
        %v311 = vld [vmem:[%s237 + $0xa0] sm:$0xff]
        %v312 = vld [vmem:[%s237 + $0xa8] sm:$0xff]
        %v313 = vld [vmem:[%s237 + $0xb0] sm:$0xff]
        %v314 = vld [vmem:[%s237 + $0xb8] sm:$0xff]
        %v315 = vld [vmem:[%s237 + $0xc0] sm:$0xff]
        %v316 = vld [vmem:[%s237 + $0xc8] sm:$0xff]
        %v317 = vld [vmem:[%s237 + $0xd0] sm:$0xff]
        %v318 = vld [vmem:[%s237 + $0xd8] sm:$0xff]
        %v319 = vld [vmem:[%s237 + $0xe0] sm:$0xff]
        %v320 = vld [vmem:[%s237 + $0xe8] sm:$0xff]
        %v321 = vld [vmem:[%s237 + $0xf0] sm:$0xff]
        %v322 = vld [vmem:[%s237 + $0xf8] sm:$0xff]
        %v325 = vunpack.c.l.s4 1966171168
        %v326 = vunpack.c.0.s8 %v325
        %v327 = vlaneseq
        %v328 = vshrl.u32 %v327, 7
        %v329 = vsub.s32 %v326, %v328
        %v330 = vrot.slane %v290, %v329
        %v331 = vcombine.high %v330, %v330
        %v333 = vunpack.c.l.s4 1966171168
        %v334 = vunpack.c.0.s8 %v333
        %v335 = vlaneseq
        %v336 = vshrl.u32 %v335, 7
        %v337 = vsub.s32 %v334, %v336
        %v338 = vrot.slane %v330, %v337
        %v340 = vunpack.c.l.s4 1966171168
        %v341 = vunpack.c.0.s8 %v340
        %v342 = vlaneseq
        %v343 = vshrl.u32 %v342, 7
        %v344 = vsub.s32 %v341, %v343
        %v345 = vrot.slane %v331, %v344
        %v380 = vunpack.c.l.b16 %v291
        %v381 = vunpack.c.h.b16 %v291
        %v382 = vunpack.c.l.b16 %v292
        %v383 = vunpack.c.h.b16 %v292
        %v384 = vunpack.c.l.b16 %v293
        %v385 = vunpack.c.h.b16 %v293
        %v386 = vunpack.c.l.b16 %v294
        %v387 = vunpack.c.h.b16 %v294
        %v388 = vunpack.c.l.b16 %v295
        %v389 = vunpack.c.h.b16 %v295
        %v390 = vunpack.c.l.b16 %v296
        %v391 = vunpack.c.h.b16 %v296
        %v392 = vunpack.c.l.b16 %v297
        %v393 = vunpack.c.h.b16 %v297
        %v394 = vunpack.c.l.b16 %v298
        %v395 = vunpack.c.h.b16 %v298
        %v396 = vunpack.c.l.b16 %v299
        %v397 = vunpack.c.h.b16 %v299
        %v398 = vunpack.c.l.b16 %v300
        %v399 = vunpack.c.h.b16 %v300
        %v400 = vunpack.c.l.b16 %v301
        %v401 = vunpack.c.h.b16 %v301
        %v402 = vunpack.c.l.b16 %v302
        %v403 = vunpack.c.h.b16 %v302
        %v404 = vunpack.c.l.b16 %v303
        %v405 = vunpack.c.h.b16 %v303
        %v406 = vunpack.c.l.b16 %v304
        %v407 = vunpack.c.h.b16 %v304
        %v408 = vunpack.c.l.b16 %v305
        %v409 = vunpack.c.h.b16 %v305
        %v410 = vunpack.c.l.b16 %v306
        %v411 = vunpack.c.h.b16 %v306
        %v412 = vunpack.c.l.b16 %v307
        %v413 = vunpack.c.h.b16 %v307
        %v414 = vunpack.c.l.b16 %v308
        %v415 = vunpack.c.h.b16 %v308
        %v416 = vunpack.c.l.b16 %v309
        %v417 = vunpack.c.h.b16 %v309
        %v418 = vunpack.c.l.b16 %v310
        %v419 = vunpack.c.h.b16 %v310
        %v420 = vunpack.c.l.b16 %v311
        %v421 = vunpack.c.h.b16 %v311
        %v422 = vunpack.c.l.b16 %v312
        %v423 = vunpack.c.h.b16 %v312
        %v424 = vunpack.c.l.b16 %v313
        %v425 = vunpack.c.h.b16 %v313
        %v426 = vunpack.c.l.b16 %v314
        %v427 = vunpack.c.h.b16 %v314
        %v428 = vunpack.c.l.b16 %v315
        %v429 = vunpack.c.h.b16 %v315
        %v430 = vunpack.c.l.b16 %v316
        %v431 = vunpack.c.h.b16 %v316
        %v432 = vunpack.c.l.b16 %v317
        %v433 = vunpack.c.h.b16 %v317
        %v434 = vunpack.c.l.b16 %v318
        %v435 = vunpack.c.h.b16 %v318
        %v436 = vunpack.c.l.b16 %v319
        %v437 = vunpack.c.h.b16 %v319
        %v438 = vunpack.c.l.b16 %v320
        %v439 = vunpack.c.h.b16 %v320
        %v440 = vunpack.c.l.b16 %v321
        %v441 = vunpack.c.h.b16 %v321
        %v442 = vunpack.c.l.b16 %v322
        %v443 = vunpack.c.h.b16 %v322
        %v444 = vpack.c.b16 %v382, %v380
        %v445 = vpack.c.b16 %v383, %v381
        %v446 = vpack.c.b16 %v386, %v384
        %v447 = vpack.c.b16 %v387, %v385
        %v448 = vpack.c.b16 %v390, %v388
        %v449 = vpack.c.b16 %v391, %v389
        %v450 = vpack.c.b16 %v394, %v392
        %v451 = vpack.c.b16 %v395, %v393
        %v452 = vpack.c.b16 %v398, %v396
        %v453 = vpack.c.b16 %v399, %v397
        %v454 = vpack.c.b16 %v402, %v400
        %v455 = vpack.c.b16 %v403, %v401
        %v456 = vpack.c.b16 %v406, %v404
        %v457 = vpack.c.b16 %v407, %v405
        %v458 = vpack.c.b16 %v410, %v408
        %v459 = vpack.c.b16 %v411, %v409
        %v460 = vpack.c.b16 %v414, %v412
        %v461 = vpack.c.b16 %v415, %v413
        %v462 = vpack.c.b16 %v418, %v416
        %v463 = vpack.c.b16 %v419, %v417
        %v464 = vpack.c.b16 %v422, %v420
        %v465 = vpack.c.b16 %v423, %v421
        %v466 = vpack.c.b16 %v426, %v424
        %v467 = vpack.c.b16 %v427, %v425
        %v468 = vpack.c.b16 %v430, %v428
        %v469 = vpack.c.b16 %v431, %v429
        %v470 = vpack.c.b16 %v434, %v432
        %v471 = vpack.c.b16 %v435, %v433
        %v472 = vpack.c.b16 %v438, %v436
        %v473 = vpack.c.b16 %v439, %v437
        %v474 = vpack.c.b16 %v442, %v440
        %v475 = vpack.c.b16 %v443, %v441
        %508 = vmatprep.subr.bf16.mxu0 %v459
        %509 = vmatpush1.bf16.msra.mxu0 %v458
        %510 = vmatprep.subr.bf16.mxu0 %v457
        %511 = vmatpush1.bf16.msra.mxu0 %v456
        %512 = vmatprep.subr.bf16.mxu0 %v455
        %513 = vmatpush1.bf16.msra.mxu0 %v454
        %514 = vmatprep.subr.bf16.mxu0 %v453
        %515 = vmatpush1.bf16.msra.mxu0 %v452
        %516 = vmatprep.subr.bf16.mxu0 %v451
        %517 = vmatpush1.bf16.msra.mxu0 %v450
        %518 = vmatprep.subr.bf16.mxu0 %v449
        %519 = vmatpush1.bf16.msra.mxu0 %v448
        %520 = vmatprep.subr.bf16.mxu0 %v447
        %521 = vmatpush1.bf16.msra.mxu0 %v446
        %522 = vmatprep.subr.bf16.mxu0 %v445
        %523 = vmatpush1.bf16.msra.mxu0 %v444
        %524 = vmatprep.subr.bf16.mxu0 %v475
        %525 = vmatpush2.bf16.msra.mxu0 %v474
        %526 = vmatprep.subr.bf16.mxu0 %v473
        %527 = vmatpush2.bf16.msra.mxu0 %v472
        %528 = vmatprep.subr.bf16.mxu0 %v471
        %529 = vmatpush2.bf16.msra.mxu0 %v470
        %530 = vmatprep.subr.bf16.mxu0 %v469
        %531 = vmatpush2.bf16.msra.mxu0 %v468
        %532 = vmatprep.subr.bf16.mxu0 %v467
        %533 = vmatpush2.bf16.msra.mxu0 %v466
        %534 = vmatprep.subr.bf16.mxu0 %v465
        %535 = vmatpush2.bf16.msra.mxu0 %v464
        %536 = vmatprep.subr.bf16.mxu0 %v463
        %537 = vmatpush2.bf16.msra.mxu0 %v462
        %538 = vmatprep.subr.bf16.mxu0 %v461
        %539 = vmatpush2.bf16.msra.mxu0 %v460
        %540 = vmatprep.mubr.bf16.mxu0 %v345
        %541 = vmatmul.mubr.bf16.gmra.mxu0 %v338
        %v542 = vpop.f32.mrf.mxu0
        %v543 = vadd.f32 0.0, %v542
        %v544 = vpop.f32.mrf.mxu0
        %v545 = vadd.f32 0.0, %v544
        %v546 = vpop.f32.mrf.mxu0
        %v547 = vpop.f32.mrf.mxu0
        %548 = vdwg.mxu0
        %v551 = vcombine.low %v543, %v545
        %v553 = vunpack.c.l.s4 1983009808
        %v554 = vunpack.c.0.s8 %v553
        %v555 = vlaneseq
        %v556 = vshrl.u32 %v555, 7
        %v557 = vsub.s32 %v554, %v556
        %v558 = vrot.slane %v551, %v557
        %v560 = vadd.f32 %v289, %v558
        %561 = vst [vmem:[#allocation2] sm:$0xf] %v560
        %p562 = scmp.eq.s32.totalorder %s28, 2
        // Predicated region
        $region49: #{tpu_custom_call.1} parent=31 // pred_check
          %p563 = pneg %p562
        $region50: #{tpu_custom_call.1} parent=31 // pred_check_branch
          %565 = sbr.rel (%p563) target = $region52
        $region51: #{tpu_custom_call.1} parent=31 // pred_region
          %v566 = vld [vmem:[#allocation2] sm:$0xf]
          %v567 = vld [vmem:[%s246] sm:$0x3]
          %v569 = vlaneseq
          %v570 = vshrl.u32 %v569, 7
          %v571 = vsub.s32 0, %v570
          %v572 = vrot.slane %v567, %v571
          %v573 = vlaneseq
          %v574 = vshrl.u32 %v573, 7
          %v575 = vsub.s32 1, %v574
          %v576 = vrot.slane %v567, %v575
          %v577 = vcombine.low %v572, %v576
          %v579 = vunpack.c.l.s4 1983009808
          %v580 = vunpack.c.0.s8 %v579
          %v581 = vlaneseq
          %v582 = vshrl.u32 %v581, 7
          %v583 = vsub.s32 %v580, %v582
          %v584 = vrot.slane %v577, %v583
          %v586 = vadd.f32 %v566, %v584
          %587 = vst [vmem:[%s278] sm:$0xf] %v586
        $region52: #{tpu_custom_call.1} parent=31 // pred_fallthru
          _
        %s588 = sand.u32 %s123, 1
        %s589 = scalar_lea.sflag [#allocation5], %s588
        %s590 = sand.u32 %s123, 1
        %s591 = smul.addr %s590, 4
        %s592 = scalar_lea.vmem [#allocation9], %s591
        // Predicated region
        $region53: #{tpu_custom_call.1} parent=31 // pred_check
          %p593 = pneg %p133
        $region54: #{tpu_custom_call.1} parent=31 // pred_check_branch
          %595 = sbr.rel (%p593) target = $region56
        $region55: #{tpu_custom_call.1} parent=31 // pred_region
          %s596 = smul.u32 2, %s27
          %s598 = ssub.s32 64, 64
          %599 = vsyncadd %s589, %s598
          %s600 = smul.addr %s596, 32
          %s601 = scalar_lea.hbm %s3, %s600
          %s603 = sshll.u32 %s592, 4
          %s604 = int_to_ptr.vmem [resolvable:$true] %s603
          %606 = dma.vmem_to_hbm [thread:$0]  %s604, 64, %s601, %s589
        $region56: #{tpu_custom_call.1} parent=31 // pred_fallthru
          _
      $region32: #{tpu_custom_call.1} parent=5 // pred_fallthru
        _
      %p607 = scmp.le.s32.totalorder 2, %s18
      // Predicated region
      $region57: #{tpu_custom_call.1} parent=5 // pred_check
        %p608 = pneg %p607
      $region58: #{tpu_custom_call.1} parent=5 // pred_check_branch
        %610 = sbr.rel (%p608) target = $region60
      $region59: #{tpu_custom_call.1} parent=5 // pred_region
        %s611 = ssub.s32 %s18, 2
        // Predicated region
        $region61: #{tpu_custom_call.1} parent=59 // pred_check
          %p612 = pneg %p139
        $region62: #{tpu_custom_call.1} parent=59 // pred_check_branch
          %614 = sbr.rel (%p612) target = $region64
        $region63: #{tpu_custom_call.1} parent=59 // pred_region
          %s615 = sand.u32 %s124, 1
          %s616 = scalar_lea.sflag [#allocation5], %s615
          %s617 = sand.u32 %s124, 1
          %s618 = smul.addr %s617, 4
          %s619 = scalar_lea.vmem [#allocation9], %s618
          %620 = dma.done %s616, 64
        $region64: #{tpu_custom_call.1} parent=59 // pred_fallthru
          _
      $region60: #{tpu_custom_call.1} parent=5 // pred_fallthru
        _
    $region6: #{tpu_custom_call.1} parent=1 // loop_footer
      %s22 = sadd.s32 1, %s18
    $region7: #{tpu_custom_call.1} parent=1 // loop_footer_branch
      %17 = sbr.rel target = $region3
    $region8: #{tpu_custom_call.1} parent=1 // loop_exit
      _
    %621 = vsyncpa [#allocation4], 1
    %s622 = scalar_lea.sflag [#allocation4], 1
    %623 = vsyncpa %s622, 1
    %624 = vsyncpa [#allocation7], 1
    %s625 = scalar_lea.sflag [#allocation7], 1
    %626 = vsyncpa %s625, 1
    %627 = vsyncpa [#allocation5], 1
    %s628 = scalar_lea.sflag [#allocation5], 1
    %629 = vsyncpa %s628, 1

</llo_original>
